<compile_context>
chip_gen: v6e
topology: v6e:2x2x1
jax: 0.10.0
libtpu: 0.0.40
codegen_flags: <defaults>
</compile_context>

<pallas_src>
import functools
import math

import jax
import jax.numpy as jnp
import numpy as np
from jax import lax
from jax.experimental import pallas as pl
from jax.experimental.pallas import tpu as pltpu


# --------------------------------------------------------------------------- #
# Kernel
# --------------------------------------------------------------------------- #
def _label_smoothing_kernel(x_ref, tgt_ref, out_ref, *,
                            size, padding_idx, smoothing,
                            n_rows, tile_rows, tiles_per_core):
    c = pl.program_id(0)          # core-split index (CORE_PARALLEL when >1 TC)
    i = pl.program_id(1)          # row-tile index within this core's range

    @pl.when(i == 0)
    def _():
        out_ref[...] = jnp.zeros_like(out_ref)

    x = x_ref[...].astype(jnp.float32)       # (tile_rows, size), f32 compute
    tgt = tgt_ref[...]                       # (tile_rows, 1) int32

    # Global (unclamped) row index of every row in this tile; rows past n_rows
    # (ragged tail of the last tile, or a whole clamped duplicate tile) are
    # masked out of both accumulators, so OOB-block garbage cannot leak.
    tile_idx = c * tiles_per_core + i
    row = tile_idx * tile_rows + lax.broadcasted_iota(jnp.int32, (tile_rows, 1), 0)
    valid = (row < n_rows) & (tgt != padding_idx)          # (tile_rows, 1)

    # log-softmax pieces (per row); ordered so at most ~2 full-tile f32
    # temporaries are live at any point (keeps VMEM spill pressure bounded).
    m = jnp.max(x, axis=-1, keepdims=True)
    lse = jnp.log(jnp.sum(jnp.exp(x - m), axis=-1, keepdims=True)) + m

    confidence = 1.0 - smoothing
    smooth_val = smoothing / (size - 1)
    # sum_c true_dist_c * log(true_dist_c), with 0*log(0) := 0, evaluated at
    # trace time (guards smoothing == 0 and smoothing == 1).
    h_const = 0.0
    if confidence > 0.0:
        h_const += confidence * math.log(confidence)
    if smooth_val > 0.0:
        h_const += (size - 1) * smooth_val * math.log(smooth_val)

    kl_row = jnp.full((tile_rows, 1), jnp.float32(h_const), dtype=jnp.float32)

    if smooth_val > 0.0:
        # sum_c logp_c computed as sum_c (x_c - lse) rather than sum_x - size*lse:
        # avoids catastrophic cancellation between two individually large terms
        # at vocab-scale `size` with large-magnitude logits. Entire pass is
        # skipped at trace time when smoothing == 0.
        sum_logp = jnp.sum(x - lse, axis=-1, keepdims=True)
        kl_row = kl_row - jnp.float32(smooth_val) * sum_logp

    if confidence != smooth_val:
        # Logit at the target class via a masked lane reduction (no gather).
        col = lax.broadcasted_iota(jnp.int32, x.shape, 1)
        x_t = jnp.sum(jnp.where(col == tgt, x, 0.0), axis=-1, keepdims=True)
        logp_t = x_t - lse
        kl_row = kl_row - jnp.float32(confidence - smooth_val) * logp_t

    # True selects: NaN/Inf from masked (OOB / ignored) rows cannot leak.
    kl_row = jnp.where(valid, kl_row, 0.0)
    cnt_row = jnp.where(valid, 1.0, 0.0)

    tile_sum = jnp.sum(kl_row)
    tile_cnt = jnp.sum(cnt_row)      # f32 count: exact up to 2^24 valid rows/call

    # Accumulate the two scalars into lanes 0/1 of sublane 0 of this core's
    # (1, 8, 128) accumulator block with a single full-block store.
    sub = lax.broadcasted_iota(jnp.int32, out_ref.shape, 1)
    lane = lax.broadcasted_iota(jnp.int32, out_ref.shape, 2)
    upd = (jnp.where((sub == 0) & (lane == 0), tile_sum, 0.0)
           + jnp.where((sub == 0) & (lane == 1), tile_cnt, 0.0))
    out_ref[...] += upd


# --------------------------------------------------------------------------- #
# Host-side helpers
# --------------------------------------------------------------------------- #
def _tensorcores_per_chip():
    """Best-effort TensorCores-per-chip: 2 on v7x-class chips, else 1."""
    try:
        info = pltpu.get_tpu_info()
        for attr in ("num_cores", "num_tensorcores", "tensorcore_count", "core_count"):
            v = getattr(info, attr, None)
            if isinstance(v, int) and 1 <= v <= 2:
                return v
    except Exception:
        pass
    try:
        kind = jax.devices()[0].device_kind.lower()
        if "v4" in kind or "v5" in kind or "v6" in kind:
            return 1            # single TensorCore per chip
        if "7" in kind:
            return 2            # v7x-class: 2 TensorCores per chip
    except Exception:
        pass
    return 1


def _auto_tile_rows(size, x_itemsize,
                    vmem_block_budget=32 * 1024 * 1024,
                    max_x_block_bytes=6 * 1024 * 1024):
    """Largest row-tile whose *padded* VMEM footprint fits the budget.

    Accounts for:
      * lane padding of the class dim (last dim rounds up to 128 lanes),
      * the (tile_rows, 1) int32 target block lane-padding to 128 lanes,
      * double buffering of both pipelined inputs,
      * ~3 full-tile f32 temporaries live in the body (f32 upcast / exp /
        iota+select for the target pick).
    The x block is additionally capped at ~6 MiB: big enough to amortize the
    ~0.35 us per-grid-step overhead on v7x's 3.2 TB/s HBM, and inside the
    4-8 MiB sweet spot measured on v5e/v6e.
    """
    padded_size = max(128, ((size + 127) // 128) * 128)
    x_row = padded_size * int(x_itemsize)       # bytes/row of the x block in VMEM
    tgt_row = 128 * 4                           # (tile_rows, 1) int32 -> 128 lanes
    tmp_row = 3 * padded_size * 4               # live f32 temporaries
    per_row = 2 * (x_row + tgt_row) + tmp_row   # 2x = double buffering
    tile_rows = vmem_block_budget // per_row
    tile_rows = min(tile_rows, max_x_block_bytes // x_row)
    tile_rows = int(max(8, min(tile_rows, 32768)))
    return (tile_rows // 8) * 8


def label_smoothing_loss(x, target, *, size, padding_idx, smoothing,
                         normalize_length=False, tile_rows=None,
                         num_core_splits=None):
    """Pallas implementation of LabelSmoothingLoss.forward. Returns scalar f32.

    x: (batch, seqlen, size) float (f32 or bf16 — dtype is passed through to HBM);
    target: (batch, seqlen) int (padding_idx marks ignored positions).
    """
    assert x.shape[-1] == size
    batch_size = x.shape[0]

    # dtype passthrough: bf16 activations stay bf16 in HBM (kernel upcasts
    # per-tile); this kernel is HBM-bound, so halving bytes/elem is ~2x wall.
    xf = x.reshape(-1, size)
    tf = target.reshape(-1, 1).astype(jnp.int32)
    n = xf.shape[0]

    if tile_rows is None:
        tile_rows = _auto_tile_rows(size, jnp.dtype(xf.dtype).itemsize)
    tile_rows = min(int(tile_rows), ((n + 7) // 8) * 8)
    tile_rows = max(8, (tile_rows // 8) * 8)
    num_tiles = -(-n // tile_rows)

    if num_core_splits is None:
        num_core_splits = _tensorcores_per_chip()
    # Never split finer than the number of tiles (avoids fully-masked
    # duplicate tiles / wasted HBM reads on single-tile problems).
    num_core_splits = max(1, min(int(num_core_splits), num_tiles))

    def _launch(splits):
        tiles_per_core = -(-num_tiles // splits)
        kernel = functools.partial(
            _label_smoothing_kernel, size=size, padding_idx=padding_idx,
            smoothing=smoothing, n_rows=n, tile_rows=tile_rows,
            tiles_per_core=tiles_per_core)

        def in_index_map(c, i):
            # Clamp so a core whose logical tile index runs past the array
            # re-reads an in-bounds tile; its rows are masked in-kernel via the
            # *unclamped* global row index.
            t = jnp.minimum(c * tiles_per_core + i, num_tiles - 1)
            return (t, 0)

        if splits > 1:
            # CORE_PARALLEL actually shards the leading axis across TensorCores
            # (plain "parallel" is a codegen no-op per measured data).
            dim_sem = (pltpu.CORE_PARALLEL, pltpu.ARBITRARY)
        else:
            dim_sem = (pltpu.ARBITRARY, pltpu.ARBITRARY)

        return pl.pallas_call(
            kernel,
            out_shape=jax.ShapeDtypeStruct((splits, 8, 128), jnp.float32),
            grid_spec=pltpu.PrefetchScalarGridSpec(
                num_scalar_prefetch=0,
                grid=(splits, tiles_per_core),
                in_specs=[pl.BlockSpec((tile_rows, size), in_index_map),
                          pl.BlockSpec((tile_rows, 1), in_index_map)],
                out_specs=pl.BlockSpec((1, 8, 128), lambda c, i: (c, 0, 0))),
            compiler_params=pltpu.CompilerParams(
                dimension_semantics=dim_sem,
                vmem_limit_bytes=48 * 1024 * 1024),
        )(xf, tf)

    if num_core_splits > 1:
        # Conservative: if the 2-TensorCore path fails to lower on this chip,
        # fall back to the single-core grid rather than failing the call.
        try:
            partials = jax.block_until_ready(_launch(num_core_splits))
        except Exception:
            partials = _launch(1)
    else:
        partials = _launch(1)

    kl_sum = jnp.sum(partials[:, 0, 0])
    cnt = jnp.sum(partials[:, 0, 1])
    denom = cnt if normalize_length else jnp.float32(batch_size)
    return kl_sum / denom


# --------------------------------------------------------------------------- #
# Pure-JAX reference (mirrors the PyTorch forward)
# --------------------------------------------------------------------------- #
def _reference_loss(x, target, *, size, padding_idx, smoothing, normalize_length):
    batch_size = x.shape[0]
    xf = x.reshape(-1, size).astype(jnp.float32)
    tf = target.reshape(-1)
    logp = jax.nn.log_softmax(xf, axis=-1)
    ignore = tf == padding_idx
    tclamp = jnp.where(ignore, 0, tf)
    true_dist = jnp.full_like(xf, smoothing / (size - 1))
    true_dist = true_dist.at[jnp.arange(xf.shape[0]), tclamp].set(1.0 - smoothing)
    pos = true_dist > 0
    kl = jnp.where(pos, true_dist * (jnp.log(jnp.where(pos, true_dist, 1.0)) - logp), 0.0)
    kl = jnp.where(ignore[:, None], 0.0, kl)
    total = xf.shape[0] - jnp.sum(ignore)
    denom = total.astype(jnp.float32) if normalize_length else jnp.float32(batch_size)
    return jnp.sum(kl) / denom


if __name__ == "__main__":
    size = 32          # number of classes
    padding_idx = -1   # ignored class id

    key = jax.random.PRNGKey(0)

    # (batch, seqlen, dtype, forced tile_rows):
    #   1) default (auto) tile -> single-tile path,
    #   2) forced 8-row tiles  -> multi-tile path + ragged tail masking,
    #   3) bf16 activations    -> HBM dtype passthrough + in-kernel upcast.
    configs = [
        (2, 8, jnp.float32, None),
        (2, 7, jnp.float32, 8),
        (2, 8, jnp.bfloat16, None),
    ]

    for batch, seqlen, dtype, forced_tile in configs:
        key, kx, kt, km = jax.random.split(key, 4)
        x = jax.random.normal(kx, (batch, seqlen, size), dtype=jnp.float32).astype(dtype)
        target = jax.random.randint(kt, (batch, seqlen), 0, size, dtype=jnp.int32)
        pad_mask = jax.random.bernoulli(km, 0.25, (batch, seqlen))
        target = jnp.where(pad_mask, padding_idx, target)

        for smoothing in (0.1, 0.0):
            for normalize_length in (False, True):
                out = label_smoothing_loss(
                    x, target, size=size, padding_idx=padding_idx,
                    smoothing=smoothing, normalize_length=normalize_length,
                    tile_rows=forced_tile)
                out = jax.block_until_ready(out)
                ref = _reference_loss(
                    x, target, size=size, padding_idx=padding_idx,
                    smoothing=smoothing, normalize_length=normalize_length)
                np.testing.assert_allclose(np.asarray(out), np.asarray(ref),
                                           rtol=2e-5, atol=2e-4)

    print("KERNEL_OK")
</pallas_src>

<mosaic_0001>
module attributes {stable_mosaic.version = 11 : i64} {
  func.func @_label_smoothing_kernel(%arg0: i32, %arg1: i32, %arg2: memref<16x32xf32, #tpu.memory_space<vmem>>, %arg3: memref<16x1xi32, #tpu.memory_space<vmem>>, %arg4: memref<1x8x128xf32, #tpu.memory_space<vmem>>) attributes {dimension_semantics = [#tpu.dimension_semantics<arbitrary>, #tpu.dimension_semantics<arbitrary>], iteration_bounds = array<i64: 1, 1>, scalar_prefetch = 0 : i64, scratch_operands = 0 : i64, tpu.core_type = #tpu.core_type<tc>, window_params = [{transform_indices = @transform_0, window_bounds = array<i64: 16, 32>}, {transform_indices = @transform_1, window_bounds = array<i64: 16, 1>}, {transform_indices = @transform_2, window_bounds = array<i64: 1, 8, 128>}]} {
    %c0_i32 = arith.constant 0 : i32
    %0 = arith.cmpi eq, %arg1, %c0_i32 : i32
    %1 = arith.extui %0 : i1 to i32
    %c0_i32_0 = arith.constant 0 : i32
    %2 = arith.cmpi ne, %1, %c0_i32_0 : i32
    scf.if %2 {
      %cst_29 = arith.constant 0.000000e+00 : f32
      %79 = vector.broadcast %cst_29 : f32 to vector<1x8x128xf32>
      %c0_30 = arith.constant 0 : index
      %c0_31 = arith.constant 0 : index
      %c0_32 = arith.constant 0 : index
      %80 = vector.load %arg4[%c0_30, %c0_31, %c0_32] : memref<1x8x128xf32, #tpu.memory_space<vmem>>, vector<1x8x128xf32>
      tpu.vector_store %arg4[%c0_30, %c0_31, %c0_32], %79 {strides = array<i32>} : memref<1x8x128xf32, #tpu.memory_space<vmem>>, vector<1x8x128xf32>,
    } else {
    }
    %c0 = arith.constant 0 : index
    %c0_1 = arith.constant 0 : index
    %3 = vector.load %arg2[%c0, %c0_1] : memref<16x32xf32, #tpu.memory_space<vmem>>, vector<16x32xf32>
    %c0_2 = arith.constant 0 : index
    %c0_3 = arith.constant 0 : index
    %4 = vector.load %arg3[%c0_2, %c0_3] : memref<16x1xi32, #tpu.memory_space<vmem>>, vector<16x1xi32>
    %c1_i32 = arith.constant 1 : i32
    %5 = arith.muli %arg0, %c1_i32 : i32
    %6 = arith.addi %5, %arg1 : i32
    %c16_i32 = arith.constant 16 : i32
    %7 = arith.muli %6, %c16_i32 : i32
    %8 = tpu.iota {dimensions = array<i32: 0>} : vector<16x1xi32>
    %9 = vector.broadcast %7 : i32 to vector<16x1xi32>
    %10 = arith.addi %9, %8 : vector<16x1xi32>
    %c16_i32_4 = arith.constant 16 : i32
    %11 = vector.broadcast %c16_i32_4 : i32 to vector<16x1xi32>
    %12 = arith.cmpi slt, %10, %11 : vector<16x1xi32>
    %c-1_i32 = arith.constant -1 : i32
    %13 = vector.broadcast %c-1_i32 : i32 to vector<16x1xi32>
    %14 = arith.cmpi ne, %4, %13 : vector<16x1xi32>
    %15 = arith.andi %12, %14 : vector<16x1xi1>
    %cst = arith.constant dense<0xFF800000> : vector<16xf32>
    %16 = vector.multi_reduction <maximumf>, %3, %cst [1] : vector<16x32xf32> to vector<16xf32>
    %17 = vector.shape_cast %16 : vector<16xf32> to vector<16x1xf32>
    %18 = vector.broadcast %17 : vector<16x1xf32> to vector<16x32xf32>
    %19 = arith.subf %3, %18 : vector<16x32xf32>
    %20 = math.exp %19 : vector<16x32xf32>
    %cst_5 = arith.constant dense<0.000000e+00> : vector<16xf32>
    %21 = vector.multi_reduction <add>, %20, %cst_5 [1] : vector<16x32xf32> to vector<16xf32>
    %22 = vector.shape_cast %21 : vector<16xf32> to vector<16x1xf32>
    %23 = math.log %22 : vector<16x1xf32>
    %24 = arith.addf %23, %17 : vector<16x1xf32>
    %cst_6 = arith.constant -0.668481708 : f32
    %25 = vector.broadcast %cst_6 : f32 to vector<16x1xf32>
    %26 = vector.broadcast %24 : vector<16x1xf32> to vector<16x32xf32>
    %27 = arith.subf %3, %26 : vector<16x32xf32>
    %cst_7 = arith.constant dense<0.000000e+00> : vector<16xf32>
    %28 = vector.multi_reduction <add>, %27, %cst_7 [1] : vector<16x32xf32> to vector<16xf32>
    %29 = vector.shape_cast %28 : vector<16xf32> to vector<16x1xf32>
    %cst_8 = arith.constant 0.0032258064 : f32
    %30 = vector.broadcast %cst_8 : f32 to vector<16x1xf32>
    %31 = arith.mulf %30, %29 : vector<16x1xf32>
    %32 = arith.subf %25, %31 : vector<16x1xf32>
    %33 = tpu.iota {dimensions = array<i32: 1>} : vector<16x32xi32>
    %34 = vector.broadcast %4 : vector<16x1xi32> to vector<16x32xi32>
    %35 = arith.cmpi eq, %33, %34 : vector<16x32xi32>
    %cst_9 = arith.constant 0.000000e+00 : f32
    %36 = vector.broadcast %cst_9 : f32 to vector<16x32xf32>
    %37 = arith.select %35, %3, %36 : vector<16x32xi1>, vector<16x32xf32>
    %cst_10 = arith.constant dense<0.000000e+00> : vector<16xf32>
    %38 = vector.multi_reduction <add>, %37, %cst_10 [1] : vector<16x32xf32> to vector<16xf32>
    %39 = vector.shape_cast %38 : vector<16xf32> to vector<16x1xf32>
    %40 = arith.subf %39, %24 : vector<16x1xf32>
    %cst_11 = arith.constant 0.896774172 : f32
    %41 = vector.broadcast %cst_11 : f32 to vector<16x1xf32>
    %42 = arith.mulf %41, %40 : vector<16x1xf32>
    %43 = arith.subf %32, %42 : vector<16x1xf32>
    %cst_12 = arith.constant 0.000000e+00 : f32
    %44 = vector.broadcast %cst_12 : f32 to vector<16x1xf32>
    %45 = arith.select %15, %43, %44 : vector<16x1xi1>, vector<16x1xf32>
    %cst_13 = arith.constant 1.000000e+00 : f32
    %cst_14 = arith.constant 0.000000e+00 : f32
    %46 = vector.broadcast %cst_13 : f32 to vector<16x1xf32>
    %47 = vector.broadcast %cst_14 : f32 to vector<16x1xf32>
    %48 = arith.select %15, %46, %47 : vector<16x1xi1>, vector<16x1xf32>
    %49 = vector.shape_cast %45 : vector<16x1xf32> to vector<1x16x1xf32>
    %cst_15 = arith.constant dense<0.000000e+00> : vector<1xf32>
    %50 = vector.multi_reduction <add>, %49, %cst_15 [1, 2] : vector<1x16x1xf32> to vector<1xf32>
    %51 = vector.shape_cast %50 : vector<1xf32> to vector<1x1x1xf32>
    %52 = vector.extract %51[0, 0, 0] : f32 from vector<1x1x1xf32>
    %53 = vector.shape_cast %48 : vector<16x1xf32> to vector<1x16x1xf32>
    %cst_16 = arith.constant dense<0.000000e+00> : vector<1xf32>
    %54 = vector.multi_reduction <add>, %53, %cst_16 [1, 2] : vector<1x16x1xf32> to vector<1xf32>
    %55 = vector.shape_cast %54 : vector<1xf32> to vector<1x1x1xf32>
    %56 = vector.extract %55[0, 0, 0] : f32 from vector<1x1x1xf32>
    %57 = tpu.iota {dimensions = array<i32: 1>} : vector<1x8x128xi32>
    %58 = tpu.iota {dimensions = array<i32: 2>} : vector<1x8x128xi32>
    %c0_i32_17 = arith.constant 0 : i32
    %59 = vector.broadcast %c0_i32_17 : i32 to vector<1x8x128xi32>
    %60 = arith.cmpi eq, %57, %59 : vector<1x8x128xi32>
    %c0_i32_18 = arith.constant 0 : i32
    %61 = vector.broadcast %c0_i32_18 : i32 to vector<1x8x128xi32>
    %62 = arith.cmpi eq, %58, %61 : vector<1x8x128xi32>
    %63 = arith.andi %60, %62 : vector<1x8x128xi1>
    %cst_19 = arith.constant 0.000000e+00 : f32
    %64 = vector.broadcast %52 : f32 to vector<1x8x128xf32>
    %65 = vector.broadcast %cst_19 : f32 to vector<1x8x128xf32>
    %66 = arith.select %63, %64, %65 : vector<1x8x128xi1>, vector<1x8x128xf32>
    %c0_i32_20 = arith.constant 0 : i32
    %67 = vector.broadcast %c0_i32_20 : i32 to vector<1x8x128xi32>
    %68 = arith.cmpi eq, %57, %67 : vector<1x8x128xi32>
    %c1_i32_21 = arith.constant 1 : i32
    %69 = vector.broadcast %c1_i32_21 : i32 to vector<1x8x128xi32>
    %70 = arith.cmpi eq, %58, %69 : vector<1x8x128xi32>
    %71 = arith.andi %68, %70 : vector<1x8x128xi1>
    %cst_22 = arith.constant 0.000000e+00 : f32
    %72 = vector.broadcast %56 : f32 to vector<1x8x128xf32>
    %73 = vector.broadcast %cst_22 : f32 to vector<1x8x128xf32>
    %74 = arith.select %71, %72, %73 : vector<1x8x128xi1>, vector<1x8x128xf32>
    %75 = arith.addf %66, %74 : vector<1x8x128xf32>
    %c0_23 = arith.constant 0 : index
    %c0_24 = arith.constant 0 : index
    %c0_25 = arith.constant 0 : index
    %76 = vector.load %arg4[%c0_23, %c0_24, %c0_25] : memref<1x8x128xf32, #tpu.memory_space<vmem>>, vector<1x8x128xf32>
    %77 = arith.addf %76, %75 : vector<1x8x128xf32>
    %c0_26 = arith.constant 0 : index
    %c0_27 = arith.constant 0 : index
    %c0_28 = arith.constant 0 : index
    %78 = vector.load %arg4[%c0_26, %c0_27, %c0_28] : memref<1x8x128xf32, #tpu.memory_space<vmem>>, vector<1x8x128xf32>
    tpu.vector_store %arg4[%c0_26, %c0_27, %c0_28], %77 {strides = array<i32>} : memref<1x8x128xf32, #tpu.memory_space<vmem>>, vector<1x8x128xf32>,
    return
  }
  func.func @transform_0(%arg0: i32, %arg1: i32) -> (i32, i32) {
    %c1_i32 = arith.constant 1 : i32
    %0 = arith.muli %arg0, %c1_i32 : i32
    %1 = arith.addi %0, %arg1 : i32
    %c0_i32 = arith.constant 0 : i32
    %2 = arith.minsi %1, %c0_i32 : i32
    %c0_i32_0 = arith.constant 0 : i32
    %c0_i32_1 = arith.constant 0 : i32
    return %2, %c0_i32_0 : i32, i32
  }
  func.func @transform_1(%arg0: i32, %arg1: i32) -> (i32, i32) {
    %c1_i32 = arith.constant 1 : i32
    %0 = arith.muli %arg0, %c1_i32 : i32
    %1 = arith.addi %0, %arg1 : i32
    %c0_i32 = arith.constant 0 : i32
    %2 = arith.minsi %1, %c0_i32 : i32
    %c0_i32_0 = arith.constant 0 : i32
    %c0_i32_1 = arith.constant 0 : i32
    return %2, %c0_i32_0 : i32, i32
  }
  func.func @transform_2(%arg0: i32, %arg1: i32) -> (i32, i32, i32) {
    %c0_i32 = arith.constant 0 : i32
    %c0_i32_0 = arith.constant 0 : i32
    %c0_i32_1 = arith.constant 0 : i32
    return %arg0, %c0_i32, %c0_i32_0 : i32, i32, i32
  }
}

</mosaic_0001>

<llo_original>
// kernel: tpu_custom_call.1
$region0: #{tpu_custom_call.1}
  #allocation0 [shape = 'u32[]', space=smem, size = 0x4, offset = 0x4, fixed_abs, tag = 'smem constant byte address 0x4 - core index']
  #allocation1 [shape = 'u32[144,128]{1,0:T(1,128)}', space=vmem, size = 0x12000, scoped, tag = 'internal scratch']
  %s0 = inlined_call_operand.vmem [shape: f32[16,32], index: 0, kind: input, shape index: {}]
  %s1 = inlined_call_operand.vmem [shape: s32[16,1], index: 1, kind: input, shape index: {}]
  %s2 = inlined_call_operand.hbm [shape: f32[1,8,128], index: 2, kind: output, shape index: {}]
  %s3 = sld [smem:[#allocation0]]
  $region22: #{tpu_custom_call.1} parent=0
    _
  %s5 = ssub.s32 1, %s3
  %s6 = scalar_select 0, %s5, %s3
  $region1: #{tpu_custom_call.1} parent=0
    #allocation2 [shape = 'u8[4096]{0}', space=vmem, size = 0x1000, scoped, tag = 'output window, operand 0, single buffered']
    #allocation3 [shape = 's32[1]{0}', space=sflag, size = 0x4, scoped, tag = 'scoped memory for tpu_custom_call.1']
    %7 = vsyncpa [#allocation3], 0
    // Predicated region
    $region2: #{tpu_custom_call.1} parent=1 // pred_check
      _
    $region3: #{tpu_custom_call.1} parent=1 // pred_check_branch
      %9 = sbr.rel (0) target = $region5
    $region4: #{tpu_custom_call.1} parent=1 // pred_region
      %s10 = sadd.s32 0, 0
      %p11 = scmp.lt.s32.totalorder %s10, 0
      %s12 = scalar_select %p11, %s10, 0
      %s13 = smul.u32 2, %s12
      %p14 = scmp.lt.s32.totalorder %s13, 1
      %s15 = scalar_select %p14, %s13, 1
      %s16 = smul.addr %s15, 8
      %s17 = scalar_lea.vmem %s0, %s16
      %s18 = sadd.s32 0, 0
      %p19 = scmp.lt.s32.totalorder %s18, 0
      %s20 = scalar_select %p19, %s18, 0
      %s21 = smul.u32 2, %s20
    $region5: #{tpu_custom_call.1} parent=1 // pred_fallthru
      _
    // Predicated region
    $region6: #{tpu_custom_call.1} parent=1 // pred_check
      _
    $region7: #{tpu_custom_call.1} parent=1 // pred_check_branch
      %23 = sbr.rel (0) target = $region9
    $region8: #{tpu_custom_call.1} parent=1 // pred_region
      %s24 = sadd.s32 0, 0
      %p25 = scmp.lt.s32.totalorder %s24, 0
      %s26 = scalar_select %p25, %s24, 0
      %s27 = smul.u32 2, %s26
      %p28 = scmp.lt.s32.totalorder %s27, 1
      %s29 = scalar_select %p28, %s27, 1
      %s30 = smul.addr %s29, 8
      %s31 = scalar_lea.vmem %s1, %s30
      %s32 = sadd.s32 0, 0
      %p33 = scmp.lt.s32.totalorder %s32, 0
      %s34 = scalar_select %p33, %s32, 0
      %s35 = smul.u32 2, %s34
    $region9: #{tpu_custom_call.1} parent=1 // pred_fallthru
      _
    %s36 = sadd.s32 0, 0
    %p37 = scmp.lt.s32.totalorder %s36, 0
    %s38 = scalar_select %p37, %s36, 0
    %s39 = smul.u32 2, %s38
    %p40 = scmp.lt.s32.totalorder %s39, 1
    %s41 = scalar_select %p40, %s39, 1
    %s42 = smul.addr %s41, 8
    %s43 = scalar_lea.vmem %s0, %s42
    %s44 = sadd.s32 0, 0
    %p45 = scmp.lt.s32.totalorder %s44, 0
    %s46 = scalar_select %p45, %s44, 0
    %s47 = smul.u32 2, %s46
    %p48 = scmp.lt.s32.totalorder %s47, 1
    %s49 = scalar_select %p48, %s47, 1
    %s50 = smul.addr %s49, 8
    %s51 = scalar_lea.vmem %s1, %s50
    %s52 = sadd.s32 0, 0
    %p53 = scmp.lt.s32.totalorder %s52, 0
    %s54 = scalar_select %p53, %s52, 0
    %s55 = smul.u32 2, %s54
    %p56 = scmp.lt.s32.totalorder %s55, 1
    %s57 = scalar_select %p56, %s55, 1
    %s58 = smul.addr %s57, 8
    %s59 = scalar_lea.vmem %s0, %s58
    %s60 = sadd.s32 0, 0
    %p61 = scmp.lt.s32.totalorder %s60, 0
    %s62 = scalar_select %p61, %s60, 0
    %s63 = smul.u32 2, %s62
    %s64 = sadd.s32 0, 0
    %p65 = scmp.lt.s32.totalorder %s64, 0
    %s66 = scalar_select %p65, %s64, 0
    %s67 = smul.u32 2, %s66
    %p68 = scmp.lt.s32.totalorder %s67, 1
    %s69 = scalar_select %p68, %s67, 1
    %s70 = smul.addr %s69, 8
    %s71 = scalar_lea.vmem %s1, %s70
    %s72 = sadd.s32 0, 0
    %p73 = scmp.lt.s32.totalorder %s72, 0
    %s74 = scalar_select %p73, %s72, 0
    %s75 = smul.u32 2, %s74
    %p76 = scmp.eq.s32.totalorder 0, 0
    // Predicated region
    $region10: #{tpu_custom_call.1} parent=1 // pred_check
      %p77 = pneg %p76
    $region11: #{tpu_custom_call.1} parent=1 // pred_check_branch
      %79 = sbr.rel (%p77) target = $region13
    $region12: #{tpu_custom_call.1} parent=1 // pred_region
      %80 = vst [vmem:[#allocation2] sm:$0xff] 0.0
    $region13: #{tpu_custom_call.1} parent=1 // pred_fallthru
      _
    %v81 = vld [vmem:[%s59] sm:$0xff]
    %v82 = vld [vmem:[%s59 + $0x8] sm:$0xff]
    %v83 = vld [vmem:[%s71] sm:$0xff]
    %v84 = vld [vmem:[%s71 + $0x8] sm:$0xff]
    %s85 = sadd.s32 0, 0
    %s86 = smul.u32 %s85, 16
    %v87 = vlaneseq
    %v88 = vshrl.u32 %v87, 7
    %v89 = vadd.s32 %v88, 8
    %v90 = vstv %s86
    %v91 = vadd.s32 %v90, %v88
    %v92 = vadd.s32 %v90, %v89
    %vm93 = vcmp.lt.s32.totalorder %v91, 16
    %vm94 = vcmp.lt.s32.totalorder %v92, 16
    %vm95 = vcmp.ne.s32.totalorder %v83, 4294967295
    %vm96 = vcmp.ne.s32.totalorder %v84, 4294967295
    %vm97 = vmand %vm93, %vm95
    %vm98 = vmand %vm94, %vm96
    %vm99 = vcmask 261120
    %v100 = vsel %vm99, %v81, -inf
    %101 = vmax.xlane.f32.xlu0 %v100
    %v102 = vpop.xlane.xlu0 %101
    %v103 = vsel %vm99, %v82, -inf
    %104 = vmax.xlane.f32.xlu0 %v103
    %v105 = vpop.xlane.xlu0 %104
    %v106 = vsub.f32 %v81, %v102
    %v107 = vsub.f32 %v82, %v105
    %v108 = vmul.f32 %v106, 1.442695
    %v109 = vpow.pop %v108
    %v110 = vmul.f32 %v107, 1.442695
    %v111 = vpow.pop %v110
    %v112 = vsel %vm99, %v109, 0.0
    %113 = vadd.xlane.f32.xlu0 %v112
    %v114 = vpop.xlane.xlu0 %113
    %v115 = vsel %vm99, %v111, 0.0
    %116 = vadd.xlane.f32.xlu0 %v115
    %v117 = vpop.xlane.xlu0 %116
    %v118 = vlog2.pop %v114
    %v119 = vmul.f32 %v118, 0.6931472
    %v120 = vlog2.pop %v117
    %v121 = vmul.f32 %v120, 0.6931472
    %v122 = vadd.f32 %v119, %v102
    %v123 = vadd.f32 %v121, %v105
    %v124 = vsub.f32 %v81, %v122
    %v125 = vsub.f32 %v82, %v123
    %v126 = vsel %vm99, %v124, 0.0
    %127 = vadd.xlane.f32.xlu0 %v126
    %v128 = vpop.xlane.xlu0 %127
    %v129 = vsel %vm99, %v125, 0.0
    %130 = vadd.xlane.f32.xlu0 %v129
    %v131 = vpop.xlane.xlu0 %130
    %v132 = vmul.f32 %v128, 0.0032258064
    %v133 = vmul.f32 %v131, 0.0032258064
    %v134 = vsub.f32 -0.6684817, %v132
    %v135 = vsub.f32 -0.6684817, %v133
    %v136 = vlaneseq
    %v137 = vand.u32 %v136, 127
    %138 = vset.pattern.permute.xlu0 0
    %139 = vperm.xlu0 %138, %v83
    %v140 = vpop.permute.xlu0 %139
    %141 = vset.pattern.permute.xlu0 0
    %142 = vperm.xlu0 %141, %v84
    %v143 = vpop.permute.xlu0 %142
    %vm144 = vcmp.eq.s32.totalorder %v137, %v140
    %vm145 = vcmp.eq.s32.totalorder %v137, %v143
    %v146 = vsel %vm144, %v81, 0.0
    %v147 = vsel %vm145, %v82, 0.0
    %v148 = vsel %vm99, %v146, 0.0
    %149 = vadd.xlane.f32.xlu0 %v148
    %v150 = vpop.xlane.xlu0 %149
    %v151 = vsel %vm99, %v147, 0.0
    %152 = vadd.xlane.f32.xlu0 %v151
    %v153 = vpop.xlane.xlu0 %152
    %v154 = vsub.f32 %v150, %v122
    %v155 = vsub.f32 %v153, %v123
    %v156 = vmul.f32 %v154, 0.8967742
    %v157 = vmul.f32 %v155, 0.8967742
    %v158 = vsub.f32 %v134, %v156
    %v159 = vsub.f32 %v135, %v157
    %v160 = vsel %vm97, %v158, 0.0
    %v161 = vsel %vm98, %v159, 0.0
    %v162 = vsel %vm97, 1.0, 0.0
    %v163 = vsel %vm98, 1.0, 0.0
    %vm164 = vcmask 7168
    %v165 = vsel %vm164, %v160, 0.0
    %v166 = vsel %vm164, %v161, 0.0
    %v167 = vadd.f32 %v165, %v166
    %168 = vadd.xlane.f32.xlu0 %v167
    %v169 = vpop.xlane.xlu0 %168
    %v170 = vrot.slane %v169, 4
    %v171 = vadd.f32 %v169, %v170
    %v172 = vrot.slane %v171, 2
    %v173 = vadd.f32 %v171, %v172
    %v174 = vrot.slane %v173, 1
    %v175 = vadd.f32 %v173, %v174
    %s176 = vtos %v175
    %v177 = vsel %vm164, %v162, 0.0
    %v178 = vsel %vm164, %v163, 0.0
    %v179 = vadd.f32 %v177, %v178
    %180 = vadd.xlane.f32.xlu0 %v179
    %v181 = vpop.xlane.xlu0 %180
    %v182 = vrot.slane %v181, 4
    %v183 = vadd.f32 %v181, %v182
    %v184 = vrot.slane %v183, 2
    %v185 = vadd.f32 %v183, %v184
    %v186 = vrot.slane %v185, 1
    %v187 = vadd.f32 %v185, %v186
    %s188 = vtos %v187
    %vm189 = vcmp.eq.s32.totalorder %v88, 0
    %vm190 = vcmp.eq.s32.totalorder %v137, 0
    %vm191 = vmand %vm189, %vm190
    %v192 = vstv %s176
    %v193 = vsel %vm191, %v192, 0.0
    %vm194 = vcmp.eq.s32.totalorder %v137, 1
    %vm195 = vmand %vm189, %vm194
    %v196 = vstv %s188
    %v197 = vsel %vm195, %v196, 0.0
    %v198 = vadd.f32 %v193, %v197
    %v199 = vld [vmem:[#allocation2] sm:$0xff]
    %v200 = vadd.f32 %v199, %v198
    %201 = vst [vmem:[#allocation2] sm:$0xff] %v200
    // Predicated region
    $region14: #{tpu_custom_call.1} parent=1 // pred_check
      _
    $region15: #{tpu_custom_call.1} parent=1 // pred_check_branch
      %203 = sbr.rel (0) target = $region17
    $region16: #{tpu_custom_call.1} parent=1 // pred_region
      %s205 = ssub.s32 128, 128
      %206 = vsyncadd [#allocation3], %s205
      %s208 = sshll.u32 [#allocation2], 4
      %s209 = int_to_ptr.vmem [resolvable:$true] %s208
      %211 = dma.vmem_to_hbm [thread:$0]  %s209, 128, %s2, [#allocation3]
    $region17: #{tpu_custom_call.1} parent=1 // pred_fallthru
      _
    // Predicated region
    $region18: #{tpu_custom_call.1} parent=1 // pred_check
      _
    $region19: #{tpu_custom_call.1} parent=1 // pred_check_branch
      %213 = sbr.rel (0) target = $region21
    $region20: #{tpu_custom_call.1} parent=1 // pred_region
      %214 = dma.done [#allocation3], 128
    $region21: #{tpu_custom_call.1} parent=1 // pred_fallthru
      _
    %215 = vsyncpa [#allocation3], 1

</llo_original>
